<compile_context>
chip_gen: v7x
topology: tpu7x:2x2x1
jax: 0.10.0
libtpu: 0.0.40
codegen_flags: <defaults>
</compile_context>

<pallas_src>
import jax
import jax.numpy as jnp
from jax.experimental import pallas as pl
from jax.experimental.pallas import tpu as pltpu

INPUT_SIZE = 784
HIDDEN_SIZE = 128
OUTPUT_SIZE = 10
PADDED_OUT = 128          # lane-dense output slab (multiple of 128)
DEFAULT_BATCH_TILE = 256  # multiple of the MXU M tile; fits VMEM easily on v5e/v6e/v7x


def mlp_kernel(x_ref, w1_ref, b1_ref, w2_ref, b2_ref, o_ref):
    # fc1: [TB, 784](bf16) @ [784, 128](bf16) -> f32 acc, bias + ReLU in f32 (VPU)
    h = jnp.dot(x_ref[...], w1_ref[...], preferred_element_type=jnp.float32)
    h = jnp.maximum(h + b1_ref[...], 0.0)
    # fc2: downcast h to the weight dtype only at the MXU input; accumulate in f32.
    out = jnp.dot(h.astype(w2_ref.dtype), w2_ref[...],
                  preferred_element_type=jnp.float32)
    o_ref[...] = (out + b2_ref[...]).astype(o_ref.dtype)


def mlp_forward(x, w1, b1, w2, b2, *, batch_tile=DEFAULT_BATCH_TILE,
                compute_dtype=jnp.bfloat16):
    """x: [B, 784] f32; w1: [784,128]; b1: [1,128]; w2: [128,10]; b2: [1,10]."""
    B = x.shape[0]

    # Batch tile: multiple of 8 (sublane), capped by the (rounded-up) batch.
    b8 = ((B + 7) // 8) * 8
    tb = min(batch_tile, b8)
    b_pad = ((B + tb - 1) // tb) * tb
    if b_pad != B:
        x = jnp.pad(x, ((0, b_pad - B), (0, 0)))

    # bf16 streaming for x / weights; f32 biases.
    x_c = x.astype(compute_dtype)
    w1_c = w1.astype(compute_dtype)
    b1_f = b1.astype(jnp.float32)
    # Zero-pad fc2 to a lane-dense 128-wide output slab.
    w2_p = (jnp.zeros((HIDDEN_SIZE, PADDED_OUT), jnp.float32)
            .at[:, :OUTPUT_SIZE].set(w2).astype(compute_dtype))
    b2_p = (jnp.zeros((1, PADDED_OUT), jnp.float32)
            .at[:, :OUTPUT_SIZE].set(b2))

    grid = (b_pad // tb,)
    out_padded = pl.pallas_call(
        mlp_kernel,
        out_shape=jax.ShapeDtypeStruct((b_pad, PADDED_OUT), jnp.float32),
        grid_spec=pl.GridSpec(
            grid=grid,
            in_specs=[
                pl.BlockSpec((tb, INPUT_SIZE), lambda i: (i, 0)),            # x tile
                pl.BlockSpec((INPUT_SIZE, HIDDEN_SIZE), lambda i: (0, 0)),   # w1 (resident)
                pl.BlockSpec((1, HIDDEN_SIZE), lambda i: (0, 0)),            # b1 (resident)
                pl.BlockSpec((HIDDEN_SIZE, PADDED_OUT), lambda i: (0, 0)),   # w2 (resident)
                pl.BlockSpec((1, PADDED_OUT), lambda i: (0, 0)),             # b2 (resident)
            ],
            out_specs=pl.BlockSpec((tb, PADDED_OUT), lambda i: (i, 0)),
        ),
        compiler_params=pltpu.CompilerParams(
            dimension_semantics=("parallel",),   # batch tiles are independent (v7x: 2 TCs)
            vmem_limit_bytes=64 * 1024 * 1024,
        ),
    )(x_c, w1_c, b1_f, w2_p, b2_p)

    return out_padded[:B, :OUTPUT_SIZE]


def init_params(key):
    # Deterministic init mimicking nn.Linear default: U(-1/sqrt(fan_in), +1/sqrt(fan_in)).
    k1, k2, k3, k4 = jax.random.split(key, 4)
    bound1 = 1.0 / jnp.sqrt(jnp.float32(INPUT_SIZE))
    bound2 = 1.0 / jnp.sqrt(jnp.float32(HIDDEN_SIZE))
    w1 = jax.random.uniform(k1, (INPUT_SIZE, HIDDEN_SIZE), jnp.float32, -bound1, bound1)
    b1 = jax.random.uniform(k2, (1, HIDDEN_SIZE), jnp.float32, -bound1, bound1)
    w2 = jax.random.uniform(k3, (HIDDEN_SIZE, OUTPUT_SIZE), jnp.float32, -bound2, bound2)
    b2 = jax.random.uniform(k4, (1, OUTPUT_SIZE), jnp.float32, -bound2, bound2)
    return w1, b1, w2, b2


if __name__ == "__main__":
    key = jax.random.PRNGKey(0)
    kx, kp = jax.random.split(key)
    batch = 8
    x = jax.random.normal(kx, (batch, INPUT_SIZE), jnp.float32)
    w1, b1, w2, b2 = init_params(kp)

    out = mlp_forward(x, w1, b1, w2, b2)
    out = jax.block_until_ready(out)
    assert out.shape == (batch, OUTPUT_SIZE)

    # Reference with the same bf16 quantization applied (kernel streams bf16, accumulates f32).
    xq = x.astype(jnp.bfloat16).astype(jnp.float32)
    w1q = w1.astype(jnp.bfloat16).astype(jnp.float32)
    w2q = w2.astype(jnp.bfloat16).astype(jnp.float32)
    h = jnp.maximum(xq @ w1q + b1, 0.0)
    ref = h.astype(jnp.bfloat16).astype(jnp.float32) @ w2q + b2
    assert jnp.allclose(out, ref, atol=1e-2, rtol=1e-2)

    # Sanity against the exact f32 forward (looser tolerance due to bf16 streaming).
    ref_f32 = jnp.maximum(x @ w1 + b1, 0.0) @ w2 + b2
    assert jnp.allclose(out, ref_f32, atol=5e-2, rtol=5e-2)

    print("KERNEL_OK")
</pallas_src>

<mosaic_0001>
module attributes {stable_mosaic.version = 11 : i64} {
  func.func @mlp_kernel(%arg0: i32, %arg1: memref<8x784xbf16, #tpu.memory_space<vmem>>, %arg2: memref<784x128xbf16, #tpu.memory_space<vmem>>, %arg3: memref<1x128xf32, #tpu.memory_space<vmem>>, %arg4: memref<128x128xbf16, #tpu.memory_space<vmem>>, %arg5: memref<1x128xf32, #tpu.memory_space<vmem>>, %arg6: memref<8x128xf32, #tpu.memory_space<vmem>>) attributes {dimension_semantics = [#tpu.dimension_semantics<parallel>], iteration_bounds = array<i64: 1>, scalar_prefetch = 0 : i64, scratch_operands = 0 : i64, tpu.core_type = #tpu.core_type<tc>, window_params = [{transform_indices = @transform_0, window_bounds = array<i64: 8, 784>}, {pipeline_mode = #tpu.pipeline_mode<synchronous>, transform_indices = @transform_1, window_bounds = array<i64: 784, 128>}, {pipeline_mode = #tpu.pipeline_mode<synchronous>, transform_indices = @transform_2, window_bounds = array<i64: 1, 128>}, {pipeline_mode = #tpu.pipeline_mode<synchronous>, transform_indices = @transform_3, window_bounds = array<i64: 128, 128>}, {pipeline_mode = #tpu.pipeline_mode<synchronous>, transform_indices = @transform_4, window_bounds = array<i64: 1, 128>}, {transform_indices = @transform_5, window_bounds = array<i64: 8, 128>}]} {
    %c0 = arith.constant 0 : index
    %c0_0 = arith.constant 0 : index
    %0 = vector.load %arg1[%c0, %c0_0] : memref<8x784xbf16, #tpu.memory_space<vmem>>, vector<8x784xbf16>
    %c0_1 = arith.constant 0 : index
    %c0_2 = arith.constant 0 : index
    %1 = vector.load %arg2[%c0_1, %c0_2] : memref<784x128xbf16, #tpu.memory_space<vmem>>, vector<784x128xbf16>
    %cst = arith.constant dense<0.000000e+00> : vector<8x128xf32>
    %2 = tpu.matmul %0, %1, %cst {dimension_numbers = #tpu.dot_dimension_numbers<[1], [0], [0], [1], [0, 0, 1, 1], [], []>} : vector<8x784xbf16>, vector<784x128xbf16>, vector<8x128xf32> -> vector<8x128xf32>
    %c0_3 = arith.constant 0 : index
    %c0_4 = arith.constant 0 : index
    %3 = vector.load %arg3[%c0_3, %c0_4] : memref<1x128xf32, #tpu.memory_space<vmem>>, vector<1x128xf32>
    %4 = vector.broadcast %3 : vector<1x128xf32> to vector<8x128xf32>
    %5 = arith.addf %2, %4 : vector<8x128xf32>
    %cst_5 = arith.constant 0.000000e+00 : f32
    %6 = vector.broadcast %cst_5 : f32 to vector<8x128xf32>
    %7 = arith.maximumf %5, %6 : vector<8x128xf32>
    %8 = arith.truncf %7 : vector<8x128xf32> to vector<8x128xbf16>
    %c0_6 = arith.constant 0 : index
    %c0_7 = arith.constant 0 : index
    %9 = vector.load %arg4[%c0_6, %c0_7] : memref<128x128xbf16, #tpu.memory_space<vmem>>, vector<128x128xbf16>
    %cst_8 = arith.constant dense<0.000000e+00> : vector<8x128xf32>
    %10 = tpu.matmul %8, %9, %cst_8 {dimension_numbers = #tpu.dot_dimension_numbers<[1], [0], [0], [1], [0, 0, 1, 1], [], []>} : vector<8x128xbf16>, vector<128x128xbf16>, vector<8x128xf32> -> vector<8x128xf32>
    %c0_9 = arith.constant 0 : index
    %c0_10 = arith.constant 0 : index
    %11 = vector.load %arg5[%c0_9, %c0_10] : memref<1x128xf32, #tpu.memory_space<vmem>>, vector<1x128xf32>
    %12 = vector.broadcast %11 : vector<1x128xf32> to vector<8x128xf32>
    %13 = arith.addf %10, %12 : vector<8x128xf32>
    %c0_11 = arith.constant 0 : index
    %c0_12 = arith.constant 0 : index
    %14 = vector.load %arg6[%c0_11, %c0_12] : memref<8x128xf32, #tpu.memory_space<vmem>>, vector<8x128xf32>
    tpu.vector_store %arg6[%c0_11, %c0_12], %13 {strides = array<i32>} : memref<8x128xf32, #tpu.memory_space<vmem>>, vector<8x128xf32>,
    return
  }
  func.func @transform_0(%arg0: i32) -> (i32, i32) {
    %c0_i32 = arith.constant 0 : i32
    %c0_i32_0 = arith.constant 0 : i32
    return %arg0, %c0_i32 : i32, i32
  }
  func.func @transform_1(%arg0: i32) -> (i32, i32) {
    %c0_i32 = arith.constant 0 : i32
    %c0_i32_0 = arith.constant 0 : i32
    %c0_i32_1 = arith.constant 0 : i32
    return %c0_i32, %c0_i32_0 : i32, i32
  }
  func.func @transform_2(%arg0: i32) -> (i32, i32) {
    %c0_i32 = arith.constant 0 : i32
    %c0_i32_0 = arith.constant 0 : i32
    %c0_i32_1 = arith.constant 0 : i32
    return %c0_i32, %c0_i32_0 : i32, i32
  }
  func.func @transform_3(%arg0: i32) -> (i32, i32) {
    %c0_i32 = arith.constant 0 : i32
    %c0_i32_0 = arith.constant 0 : i32
    %c0_i32_1 = arith.constant 0 : i32
    return %c0_i32, %c0_i32_0 : i32, i32
  }
  func.func @transform_4(%arg0: i32) -> (i32, i32) {
    %c0_i32 = arith.constant 0 : i32
    %c0_i32_0 = arith.constant 0 : i32
    %c0_i32_1 = arith.constant 0 : i32
    return %c0_i32, %c0_i32_0 : i32, i32
  }
  func.func @transform_5(%arg0: i32) -> (i32, i32) {
    %c0_i32 = arith.constant 0 : i32
    %c0_i32_0 = arith.constant 0 : i32
    return %arg0, %c0_i32 : i32, i32
  }
}

</mosaic_0001>

<llo_original>
// kernel: tpu_custom_call.1
$region0: #{tpu_custom_call.1}
  #allocation0 [shape = 'u32[]', space=smem, size = 0x4, offset = 0x4, fixed_abs, tag = 'smem constant byte address 0x4 - core index']
  #allocation1 [shape = 'u32[144,128]{1,0:T(1,128)}', space=vmem, size = 0x12000, scoped, tag = 'internal scratch']
  %s0 = inlined_call_operand.hbm [shape: bf16[8,784], index: 0, kind: input, shape index: {}]
  %s1 = inlined_call_operand.hbm [shape: bf16[784,128], index: 1, kind: input, shape index: {}]
  %s2 = inlined_call_operand.hbm [shape: f32[1,128], index: 2, kind: input, shape index: {}]
  %s3 = inlined_call_operand.hbm [shape: bf16[128,128], index: 3, kind: input, shape index: {}]
  %s4 = inlined_call_operand.hbm [shape: f32[1,128], index: 4, kind: input, shape index: {}]
  %s5 = inlined_call_operand.hbm [shape: f32[8,128], index: 5, kind: output, shape index: {}]
  %s6 = sld [smem:[#allocation0]]
  $region50: #{tpu_custom_call.1} parent=0
    _
  %s8 = ssub.s32 1, %s6
  %s9 = scalar_select 0, %s8, %s6
  $region1: #{tpu_custom_call.1} parent=0
    #allocation2 [shape = 'u8[14336]{0}', space=vmem, size = 0x3800, scoped, tag = 'input window, operand 0, single buffered']
    #allocation3 [shape = 's32[1]{0}', space=sflag, size = 0x4, scoped, tag = 'scoped memory for tpu_custom_call.1']
    #allocation4 [shape = 's32[1]{0}', space=sflag, size = 0x4, scoped, tag = 'scoped memory for tpu_custom_call.1']
    #allocation5 [shape = 'u8[200704]{0}', space=vmem, size = 0x31000, scoped, tag = 'input window, operand 1, single buffered']
    #allocation6 [shape = 's32[1]{0}', space=sflag, size = 0x4, scoped, tag = 'scoped memory for tpu_custom_call.1']
    #allocation7 [shape = 'u8[512]{0}', space=vmem, size = 0x400, scoped, tag = 'input window, operand 2, single buffered']
    #allocation8 [shape = 'u8[32768]{0}', space=vmem, size = 0x8000, scoped, tag = 'input window, operand 3, single buffered']
    #allocation9 [shape = 's32[1]{0}', space=sflag, size = 0x4, scoped, tag = 'scoped memory for tpu_custom_call.1']
    #allocation10 [shape = 'u8[512]{0}', space=vmem, size = 0x400, scoped, tag = 'input window, operand 4, single buffered']
    #allocation11 [shape = 'u8[4096]{0}', space=vmem, size = 0x1000, scoped, tag = 'output window, operand 0, single buffered']
    %10 = vsyncpa [#allocation3], 0
    %11 = vsyncpa [#allocation6], 0
    %12 = vsyncpa [#allocation9], 0
    %13 = vsyncpa [#allocation4], 0
    // Predicated region
    $region2: #{tpu_custom_call.1} parent=1 // pred_check
      _
    $region3: #{tpu_custom_call.1} parent=1 // pred_check_branch
      %15 = sbr.rel (0) target = $region5
    $region4: #{tpu_custom_call.1} parent=1 // pred_region
      %s17 = ssub.s32 448, 448
      %18 = vsyncadd [#allocation3], %s17
      %s20 = sshll.u32 [#allocation2], 4
      %s21 = int_to_ptr.vmem [resolvable:$true] %s20
      %23 = dma.hbm_to_vmem [thread:$0]  %s0, 448, %s21, [#allocation3]
    $region5: #{tpu_custom_call.1} parent=1 // pred_fallthru
      _
    // Predicated region
    $region6: #{tpu_custom_call.1} parent=1 // pred_check
      _
    $region7: #{tpu_custom_call.1} parent=1 // pred_check_branch
      %25 = sbr.rel (0) target = $region9
    $region8: #{tpu_custom_call.1} parent=1 // pred_region
      %s27 = ssub.s32 6272, 6272
      %28 = vsyncadd [#allocation6], %s27
      %s29 = sshll.u32 [#allocation5], 4
      %s30 = int_to_ptr.vmem [resolvable:$true] %s29
      %35 = dma.hbm_to_vmem [thread:$0]  %s1, 6272, %s30, [#allocation6], 64, 64, 4
    $region9: #{tpu_custom_call.1} parent=1 // pred_fallthru
      _
    // Predicated region
    $region10: #{tpu_custom_call.1} parent=1 // pred_check
      _
    $region11: #{tpu_custom_call.1} parent=1 // pred_check_branch
      %37 = sbr.rel (0) target = $region13
    $region12: #{tpu_custom_call.1} parent=1 // pred_region
      %s39 = ssub.s32 16, 16
      %40 = vsyncadd [#allocation6], %s39
      %s42 = sshll.u32 [#allocation7], 4
      %s43 = int_to_ptr.vmem [resolvable:$true] %s42
      %45 = dma.hbm_to_vmem [thread:$0]  %s2, 16, %s43, [#allocation6]
    $region13: #{tpu_custom_call.1} parent=1 // pred_fallthru
      _
    // Predicated region
    $region14: #{tpu_custom_call.1} parent=1 // pred_check
      _
    $region15: #{tpu_custom_call.1} parent=1 // pred_check_branch
      %47 = sbr.rel (0) target = $region17
    $region16: #{tpu_custom_call.1} parent=1 // pred_region
      %s49 = ssub.s32 1024, 1024
      %50 = vsyncadd [#allocation9], %s49
      %s51 = sshll.u32 [#allocation8], 4
      %s52 = int_to_ptr.vmem [resolvable:$true] %s51
      %57 = dma.hbm_to_vmem [thread:$0]  %s3, 1024, %s52, [#allocation9], 64, 64, 4
    $region17: #{tpu_custom_call.1} parent=1 // pred_fallthru
      _
    // Predicated region
    $region18: #{tpu_custom_call.1} parent=1 // pred_check
      _
    $region19: #{tpu_custom_call.1} parent=1 // pred_check_branch
      %59 = sbr.rel (0) target = $region21
    $region20: #{tpu_custom_call.1} parent=1 // pred_region
      %s61 = ssub.s32 16, 16
      %62 = vsyncadd [#allocation9], %s61
      %s64 = sshll.u32 [#allocation10], 4
      %s65 = int_to_ptr.vmem [resolvable:$true] %s64
      %67 = dma.hbm_to_vmem [thread:$0]  %s4, 16, %s65, [#allocation9]
    $region21: #{tpu_custom_call.1} parent=1 // pred_fallthru
      _
    // Predicated region
    $region22: #{tpu_custom_call.1} parent=1 // pred_check
      _
    $region23: #{tpu_custom_call.1} parent=1 // pred_check_branch
      %69 = sbr.rel (0) target = $region25
    $region24: #{tpu_custom_call.1} parent=1 // pred_region
      %70 = dma.done [#allocation3], 448
    $region25: #{tpu_custom_call.1} parent=1 // pred_fallthru
      _
    // Predicated region
    $region26: #{tpu_custom_call.1} parent=1 // pred_check
      _
    $region27: #{tpu_custom_call.1} parent=1 // pred_check_branch
      %72 = sbr.rel (0) target = $region29
    $region28: #{tpu_custom_call.1} parent=1 // pred_region
      %73 = dma.done [#allocation6], 6272
    $region29: #{tpu_custom_call.1} parent=1 // pred_fallthru
      _
    // Predicated region
    $region30: #{tpu_custom_call.1} parent=1 // pred_check
      _
    $region31: #{tpu_custom_call.1} parent=1 // pred_check_branch
      %75 = sbr.rel (0) target = $region33
    $region32: #{tpu_custom_call.1} parent=1 // pred_region
      %76 = dma.done [#allocation6], 16
    $region33: #{tpu_custom_call.1} parent=1 // pred_fallthru
      _
    // Predicated region
    $region34: #{tpu_custom_call.1} parent=1 // pred_check
      _
    $region35: #{tpu_custom_call.1} parent=1 // pred_check_branch
      %78 = sbr.rel (0) target = $region37
    $region36: #{tpu_custom_call.1} parent=1 // pred_region
      %79 = dma.done [#allocation9], 1024
    $region37: #{tpu_custom_call.1} parent=1 // pred_fallthru
      _
    // Predicated region
    $region38: #{tpu_custom_call.1} parent=1 // pred_check
      _
    $region39: #{tpu_custom_call.1} parent=1 // pred_check_branch
      %81 = sbr.rel (0) target = $region41
    $region40: #{tpu_custom_call.1} parent=1 // pred_region
      %82 = dma.done [#allocation9], 16
    $region41: #{tpu_custom_call.1} parent=1 // pred_fallthru
      _
    %v84 = vld [vmem:[#allocation2] sm:$0xff]
    %v85 = vld [vmem:[#allocation2 + $0x8] sm:$0xff]
    %v86 = vld [vmem:[#allocation2 + $0x10] sm:$0xff]
    %v87 = vld [vmem:[#allocation2 + $0x18] sm:$0xf]
    %v88 = vld [vmem:[#allocation5] sm:$0xf]
    %v89 = vld [vmem:[#allocation5 + $0x4] sm:$0xf]
    %v90 = vld [vmem:[#allocation5 + $0x8] sm:$0xf]
    %v91 = vld [vmem:[#allocation5 + $0xc] sm:$0xf]
    %v92 = vld [vmem:[#allocation5 + $0x10] sm:$0xf]
    %v93 = vld [vmem:[#allocation5 + $0x14] sm:$0xf]
    %v94 = vld [vmem:[#allocation5 + $0x18] sm:$0xf]
    %v95 = vld [vmem:[#allocation5 + $0x1c] sm:$0xf]
    %v96 = vld [vmem:[#allocation5 + $0x20] sm:$0xf]
    %v97 = vld [vmem:[#allocation5 + $0x24] sm:$0xf]
    %v98 = vld [vmem:[#allocation5 + $0x28] sm:$0xf]
    %v99 = vld [vmem:[#allocation5 + $0x2c] sm:$0xf]
    %v100 = vld [vmem:[#allocation5 + $0x30] sm:$0xf]
    %v101 = vld [vmem:[#allocation5 + $0x34] sm:$0xf]
    %v102 = vld [vmem:[#allocation5 + $0x38] sm:$0xf]
    %v103 = vld [vmem:[#allocation5 + $0x3c] sm:$0xf]
    %v104 = vld [vmem:[#allocation5 + $0x40] sm:$0xf]
    %v105 = vld [vmem:[#allocation5 + $0x44] sm:$0xf]
    %v106 = vld [vmem:[#allocation5 + $0x48] sm:$0xf]
    %v107 = vld [vmem:[#allocation5 + $0x4c] sm:$0xf]
    %v108 = vld [vmem:[#allocation5 + $0x50] sm:$0xf]
    %v109 = vld [vmem:[#allocation5 + $0x54] sm:$0xf]
    %v110 = vld [vmem:[#allocation5 + $0x58] sm:$0xf]
    %v111 = vld [vmem:[#allocation5 + $0x5c] sm:$0xf]
    %v112 = vld [vmem:[#allocation5 + $0x60] sm:$0xf]
    %v113 = vld [vmem:[#allocation5 + $0x64] sm:$0xf]
    %v114 = vld [vmem:[#allocation5 + $0x68] sm:$0xf]
    %v115 = vld [vmem:[#allocation5 + $0x6c] sm:$0xf]
    %v116 = vld [vmem:[#allocation5 + $0x70] sm:$0xf]
    %v117 = vld [vmem:[#allocation5 + $0x74] sm:$0xf]
    %v118 = vld [vmem:[#allocation5 + $0x78] sm:$0xf]
    %v119 = vld [vmem:[#allocation5 + $0x7c] sm:$0xf]
    %v120 = vld [vmem:[#allocation5 + $0x80] sm:$0xf]
    %v121 = vld [vmem:[#allocation5 + $0x84] sm:$0xf]
    %v122 = vld [vmem:[#allocation5 + $0x88] sm:$0xf]
    %v123 = vld [vmem:[#allocation5 + $0x8c] sm:$0xf]
    %v124 = vld [vmem:[#allocation5 + $0x90] sm:$0xf]
    %v125 = vld [vmem:[#allocation5 + $0x94] sm:$0xf]
    %v126 = vld [vmem:[#allocation5 + $0x98] sm:$0xf]
    %v127 = vld [vmem:[#allocation5 + $0x9c] sm:$0xf]
    %v128 = vld [vmem:[#allocation5 + $0xa0] sm:$0xf]
    %v129 = vld [vmem:[#allocation5 + $0xa4] sm:$0xf]
    %v130 = vld [vmem:[#allocation5 + $0xa8] sm:$0xf]
    %v131 = vld [vmem:[#allocation5 + $0xac] sm:$0xf]
    %v132 = vld [vmem:[#allocation5 + $0xb0] sm:$0xf]
    %v133 = vld [vmem:[#allocation5 + $0xb4] sm:$0xf]
    %v134 = vld [vmem:[#allocation5 + $0xb8] sm:$0xf]
    %v135 = vld [vmem:[#allocation5 + $0xbc] sm:$0xf]
    %v136 = vld [vmem:[#allocation5 + $0xc0] sm:$0xf]
    %v137 = vld [vmem:[#allocation5 + $0xc4] sm:$0xf]
    %v138 = vld [vmem:[#allocation5 + $0xc8] sm:$0xf]
    %v139 = vld [vmem:[#allocation5 + $0xcc] sm:$0xf]
    %v140 = vld [vmem:[#allocation5 + $0xd0] sm:$0xf]
    %v141 = vld [vmem:[#allocation5 + $0xd4] sm:$0xf]
    %v142 = vld [vmem:[#allocation5 + $0xd8] sm:$0xf]
    %v143 = vld [vmem:[#allocation5 + $0xdc] sm:$0xf]
    %v144 = vld [vmem:[#allocation5 + $0xe0] sm:$0xf]
    %v145 = vld [vmem:[#allocation5 + $0xe4] sm:$0xf]
    %v146 = vld [vmem:[#allocation5 + $0xe8] sm:$0xf]
    %v147 = vld [vmem:[#allocation5 + $0xec] sm:$0xf]
    %v148 = vld [vmem:[#allocation5 + $0xf0] sm:$0xf]
    %v149 = vld [vmem:[#allocation5 + $0xf4] sm:$0xf]
    %v150 = vld [vmem:[#allocation5 + $0xf8] sm:$0xf]
    %v151 = vld [vmem:[#allocation5 + $0xfc] sm:$0xf]
    %v152 = vld [vmem:[#allocation5 + $0x100] sm:$0xf]
    %v153 = vld [vmem:[#allocation5 + $0x104] sm:$0xf]
    %v154 = vld [vmem:[#allocation5 + $0x108] sm:$0xf]
    %v155 = vld [vmem:[#allocation5 + $0x10c] sm:$0xf]
    %v156 = vld [vmem:[#allocation5 + $0x110] sm:$0xf]
    %v157 = vld [vmem:[#allocation5 + $0x114] sm:$0xf]
    %v158 = vld [vmem:[#allocation5 + $0x118] sm:$0xf]
    %v159 = vld [vmem:[#allocation5 + $0x11c] sm:$0xf]
    %v160 = vld [vmem:[#allocation5 + $0x120] sm:$0xf]
    %v161 = vld [vmem:[#allocation5 + $0x124] sm:$0xf]
    %v162 = vld [vmem:[#allocation5 + $0x128] sm:$0xf]
    %v163 = vld [vmem:[#allocation5 + $0x12c] sm:$0xf]
    %v164 = vld [vmem:[#allocation5 + $0x130] sm:$0xf]
    %v165 = vld [vmem:[#allocation5 + $0x134] sm:$0xf]
    %v166 = vld [vmem:[#allocation5 + $0x138] sm:$0xf]
    %v167 = vld [vmem:[#allocation5 + $0x13c] sm:$0xf]
    %v168 = vld [vmem:[#allocation5 + $0x140] sm:$0xf]
    %v169 = vld [vmem:[#allocation5 + $0x144] sm:$0xf]
    %v170 = vld [vmem:[#allocation5 + $0x148] sm:$0xf]
    %v171 = vld [vmem:[#allocation5 + $0x14c] sm:$0xf]
    %v172 = vld [vmem:[#allocation5 + $0x150] sm:$0xf]
    %v173 = vld [vmem:[#allocation5 + $0x154] sm:$0xf]
    %v174 = vld [vmem:[#allocation5 + $0x158] sm:$0xf]
    %v175 = vld [vmem:[#allocation5 + $0x15c] sm:$0xf]
    %v176 = vld [vmem:[#allocation5 + $0x160] sm:$0xf]
    %v177 = vld [vmem:[#allocation5 + $0x164] sm:$0xf]
    %v178 = vld [vmem:[#allocation5 + $0x168] sm:$0xf]
    %v179 = vld [vmem:[#allocation5 + $0x16c] sm:$0xf]
    %v180 = vld [vmem:[#allocation5 + $0x170] sm:$0xf]
    %v181 = vld [vmem:[#allocation5 + $0x174] sm:$0xf]
    %v182 = vld [vmem:[#allocation5 + $0x178] sm:$0xf]
    %v183 = vld [vmem:[#allocation5 + $0x17c] sm:$0xf]
    %v184 = vld [vmem:[#allocation5 + $0x180] sm:$0xf]
    %v185 = vld [vmem:[#allocation5 + $0x184] sm:$0xf]
    %v186 = vld [vmem:[#allocation7] sm:$0x1]
    %v188 = vlaneseq
    %v189 = vshrl.u32 %v188, 7
    %v190 = vsub.s32 0, %v189
    %v191 = vrot.slane %v186, %v190
    %v197 = vunpack.c.l.b16 %v84
    %v198 = vunpack.c.h.b16 %v84
    %v199 = vunpack.c.l.b16 %v85
    %v200 = vunpack.c.h.b16 %v85
    %v201 = vunpack.c.l.b16 %v86
    %v202 = vunpack.c.h.b16 %v86
    %v203 = vunpack.c.l.b16 %v87
    %v204 = vpack.c.b16 %v197, %v197
    %v205 = vpack.c.b16 %v198, %v198
    %v206 = vpack.c.b16 %v199, %v199
    %v207 = vpack.c.b16 %v200, %v200
    %v208 = vpack.c.b16 %v201, %v201
    %v209 = vpack.c.b16 %v202, %v202
    %v210 = vpack.c.b16 %v203, %v203
    %v315 = vunpack.c.l.b16 %v88
    %v316 = vunpack.c.l.b16 %v89
    %v317 = vunpack.c.l.b16 %v90
    %v318 = vunpack.c.l.b16 %v91
    %v319 = vunpack.c.l.b16 %v92
    %v320 = vunpack.c.l.b16 %v93
    %v321 = vunpack.c.l.b16 %v94
    %v322 = vunpack.c.l.b16 %v95
    %v323 = vunpack.c.l.b16 %v96
    %v324 = vunpack.c.l.b16 %v97
    %v325 = vunpack.c.l.b16 %v98
    %v326 = vunpack.c.l.b16 %v99
    %v327 = vunpack.c.l.b16 %v100
    %v328 = vunpack.c.l.b16 %v101
    %v329 = vunpack.c.l.b16 %v102
    %v330 = vunpack.c.l.b16 %v103
    %v331 = vunpack.c.l.b16 %v104
    %v332 = vunpack.c.l.b16 %v105
    %v333 = vunpack.c.l.b16 %v106
    %v334 = vunpack.c.l.b16 %v107
    %v335 = vunpack.c.l.b16 %v108
    %v336 = vunpack.c.l.b16 %v109
    %v337 = vunpack.c.l.b16 %v110
    %v338 = vunpack.c.l.b16 %v111
    %v339 = vunpack.c.l.b16 %v112
    %v340 = vunpack.c.l.b16 %v113
    %v341 = vunpack.c.l.b16 %v114
    %v342 = vunpack.c.l.b16 %v115
    %v343 = vunpack.c.l.b16 %v116
    %v344 = vunpack.c.l.b16 %v117
    %v345 = vunpack.c.l.b16 %v118
    %v346 = vunpack.c.l.b16 %v119
    %v347 = vunpack.c.l.b16 %v120
    %v348 = vunpack.c.l.b16 %v121
    %v349 = vunpack.c.l.b16 %v122
    %v350 = vunpack.c.l.b16 %v123
    %v351 = vunpack.c.l.b16 %v124
    %v352 = vunpack.c.l.b16 %v125
    %v353 = vunpack.c.l.b16 %v126
    %v354 = vunpack.c.l.b16 %v127
    %v355 = vunpack.c.l.b16 %v128
    %v356 = vunpack.c.l.b16 %v129
    %v357 = vunpack.c.l.b16 %v130
    %v358 = vunpack.c.l.b16 %v131
    %v359 = vunpack.c.l.b16 %v132
    %v360 = vunpack.c.l.b16 %v133
    %v361 = vunpack.c.l.b16 %v134
    %v362 = vunpack.c.l.b16 %v135
    %v363 = vunpack.c.l.b16 %v136
    %v364 = vunpack.c.l.b16 %v137
    %v365 = vunpack.c.l.b16 %v138
    %v366 = vunpack.c.l.b16 %v139
    %v367 = vunpack.c.l.b16 %v140
    %v368 = vunpack.c.l.b16 %v141
    %v369 = vunpack.c.l.b16 %v142
    %v370 = vunpack.c.l.b16 %v143
    %v371 = vunpack.c.l.b16 %v144
    %v372 = vunpack.c.l.b16 %v145
    %v373 = vunpack.c.l.b16 %v146
    %v374 = vunpack.c.l.b16 %v147
    %v375 = vunpack.c.l.b16 %v148
    %v376 = vunpack.c.l.b16 %v149
    %v377 = vunpack.c.l.b16 %v150
    %v378 = vunpack.c.l.b16 %v151
    %v379 = vunpack.c.l.b16 %v152
    %v380 = vunpack.c.l.b16 %v153
    %v381 = vunpack.c.l.b16 %v154
    %v382 = vunpack.c.l.b16 %v155
    %v383 = vunpack.c.l.b16 %v156
    %v384 = vunpack.c.l.b16 %v157
    %v385 = vunpack.c.l.b16 %v158
    %v386 = vunpack.c.l.b16 %v159
    %v387 = vunpack.c.l.b16 %v160
    %v388 = vunpack.c.l.b16 %v161
    %v389 = vunpack.c.l.b16 %v162
    %v390 = vunpack.c.l.b16 %v163
    %v391 = vunpack.c.l.b16 %v164
    %v392 = vunpack.c.l.b16 %v165
    %v393 = vunpack.c.l.b16 %v166
    %v394 = vunpack.c.l.b16 %v167
    %v395 = vunpack.c.l.b16 %v168
    %v396 = vunpack.c.l.b16 %v169
    %v397 = vunpack.c.l.b16 %v170
    %v398 = vunpack.c.l.b16 %v171
    %v399 = vunpack.c.l.b16 %v172
    %v400 = vunpack.c.l.b16 %v173
    %v401 = vunpack.c.l.b16 %v174
    %v402 = vunpack.c.l.b16 %v175
    %v403 = vunpack.c.l.b16 %v176
    %v404 = vunpack.c.l.b16 %v177
    %v405 = vunpack.c.l.b16 %v178
    %v406 = vunpack.c.l.b16 %v179
    %v407 = vunpack.c.l.b16 %v180
    %v408 = vunpack.c.l.b16 %v181
    %v409 = vunpack.c.l.b16 %v182
    %v410 = vunpack.c.l.b16 %v183
    %v411 = vunpack.c.l.b16 %v184
    %v412 = vunpack.c.l.b16 %v185
    %v413 = vpack.c.b16 %v316, %v315
    %v414 = vpack.c.b16 %v318, %v317
    %v415 = vpack.c.b16 %v320, %v319
    %v416 = vpack.c.b16 %v322, %v321
    %v417 = vpack.c.b16 %v324, %v323
    %v418 = vpack.c.b16 %v326, %v325
    %v419 = vpack.c.b16 %v328, %v327
    %v420 = vpack.c.b16 %v330, %v329
    %v421 = vpack.c.b16 %v332, %v331
    %v422 = vpack.c.b16 %v334, %v333
    %v423 = vpack.c.b16 %v336, %v335
    %v424 = vpack.c.b16 %v338, %v337
    %v425 = vpack.c.b16 %v340, %v339
    %v426 = vpack.c.b16 %v342, %v341
    %v427 = vpack.c.b16 %v344, %v343
    %v428 = vpack.c.b16 %v346, %v345
    %v429 = vpack.c.b16 %v348, %v347
    %v430 = vpack.c.b16 %v350, %v349
    %v431 = vpack.c.b16 %v352, %v351
    %v432 = vpack.c.b16 %v354, %v353
    %v433 = vpack.c.b16 %v356, %v355
    %v434 = vpack.c.b16 %v358, %v357
    %v435 = vpack.c.b16 %v360, %v359
    %v436 = vpack.c.b16 %v362, %v361
    %v437 = vpack.c.b16 %v364, %v363
    %v438 = vpack.c.b16 %v366, %v365
    %v439 = vpack.c.b16 %v368, %v367
    %v440 = vpack.c.b16 %v370, %v369
    %v441 = vpack.c.b16 %v372, %v371
    %v442 = vpack.c.b16 %v374, %v373
    %v443 = vpack.c.b16 %v376, %v375
    %v444 = vpack.c.b16 %v378, %v377
    %v445 = vpack.c.b16 %v380, %v379
    %v446 = vpack.c.b16 %v382, %v381
    %v447 = vpack.c.b16 %v384, %v383
    %v448 = vpack.c.b16 %v386, %v385
    %v449 = vpack.c.b16 %v388, %v387
    %v450 = vpack.c.b16 %v390, %v389
    %v451 = vpack.c.b16 %v392, %v391
    %v452 = vpack.c.b16 %v394, %v393
    %v453 = vpack.c.b16 %v396, %v395
    %v454 = vpack.c.b16 %v398, %v397
    %v455 = vpack.c.b16 %v400, %v399
    %v456 = vpack.c.b16 %v402, %v401
    %v457 = vpack.c.b16 %v404, %v403
    %v458 = vpack.c.b16 %v406, %v405
    %v459 = vpack.c.b16 %v408, %v407
    %v460 = vpack.c.b16 %v410, %v409
    %v461 = vpack.c.b16 %v412, %v411
    %vm511 = vcmask 130048
    %v513 = vsel %vm511, %v210, 0
    %515 = vmatprep.subr.bf16.mxu0 0
    %516 = vmatpush1.bf16.msra.mxu0 %v413
    %517 = vmatprep.subr.bf16.mxu0 0
    %518 = vmatpush1.bf16.msra.mxu0 %v414
    %519 = vmatprep.subr.bf16.mxu0 0
    %520 = vmatpush1.bf16.msra.mxu0 %v415
    %521 = vmatprep.subr.bf16.mxu0 0
    %522 = vmatpush1.bf16.msra.mxu0 %v416
    %523 = vmatprep.subr.bf16.mxu0 0
    %524 = vmatpush1.bf16.msra.mxu0 %v417
    %525 = vmatprep.subr.bf16.mxu0 0
    %526 = vmatpush1.bf16.msra.mxu0 %v418
    %527 = vmatprep.subr.bf16.mxu0 0
    %528 = vmatpush1.bf16.msra.mxu0 %v419
    %529 = vmatprep.subr.bf16.mxu0 0
    %530 = vmatpush1.bf16.msra.mxu0 %v420
    %531 = vmatprep.subr.bf16.mxu0 0
    %532 = vmatpush1.bf16.msra.mxu0 %v421
    %533 = vmatprep.subr.bf16.mxu0 0
    %534 = vmatpush1.bf16.msra.mxu0 %v422
    %535 = vmatprep.subr.bf16.mxu0 0
    %536 = vmatpush1.bf16.msra.mxu0 %v423
    %537 = vmatprep.subr.bf16.mxu0 0
    %538 = vmatpush1.bf16.msra.mxu0 %v424
    %539 = vmatprep.subr.bf16.mxu0 0
    %540 = vmatpush1.bf16.msra.mxu0 %v425
    %541 = vmatprep.subr.bf16.mxu0 0
    %542 = vmatpush1.bf16.msra.mxu0 %v426
    %543 = vmatprep.subr.bf16.mxu0 0
    %544 = vmatpush1.bf16.msra.mxu0 %v427
    %545 = vmatprep.subr.bf16.mxu0 0
    %546 = vmatpush1.bf16.msra.mxu0 %v428
    %547 = vmatprep.mubr.bf16.mxu0 %v205
    %548 = vmatmul.mubr.bf16.gmra.mrb[0].mxu0 %v204
    %v549 = vpop.f32.mrb[0].mxu0
    %v550 = vadd.f32 %v191, %v549
    %v551 = vpop.f32.mrb[0].mxu0
    %v552 = vpop.f32.mrb[0].mxu0
    %v553 = vpop.f32.mrb[0].mxu0
    %554 = vdwg.mxu0
    %555 = vmatprep.subr.bf16.mxu0 0
    %556 = vmatpush1.bf16.msra.mxu0 %v429
    %557 = vmatprep.subr.bf16.mxu0 0
    %558 = vmatpush1.bf16.msra.mxu0 %v430
    %559 = vmatprep.subr.bf16.mxu0 0
    %560 = vmatpush1.bf16.msra.mxu0 %v431
    %561 = vmatprep.subr.bf16.mxu0 0
    %562 = vmatpush1.bf16.msra.mxu0 %v432
    %563 = vmatprep.subr.bf16.mxu0 0
    %564 = vmatpush1.bf16.msra.mxu0 %v433
    %565 = vmatprep.subr.bf16.mxu0 0
    %566 = vmatpush1.bf16.msra.mxu0 %v434
    %567 = vmatprep.subr.bf16.mxu0 0
    %568 = vmatpush1.bf16.msra.mxu0 %v435
    %569 = vmatprep.subr.bf16.mxu0 0
    %570 = vmatpush1.bf16.msra.mxu0 %v436
    %571 = vmatprep.subr.bf16.mxu0 0
    %572 = vmatpush1.bf16.msra.mxu0 %v437
    %573 = vmatprep.subr.bf16.mxu0 0
    %574 = vmatpush1.bf16.msra.mxu0 %v438
    %575 = vmatprep.subr.bf16.mxu0 0
    %576 = vmatpush1.bf16.msra.mxu0 %v439
    %577 = vmatprep.subr.bf16.mxu0 0
    %578 = vmatpush1.bf16.msra.mxu0 %v440
    %579 = vmatprep.subr.bf16.mxu0 0
    %580 = vmatpush1.bf16.msra.mxu0 %v441
    %581 = vmatprep.subr.bf16.mxu0 0
    %582 = vmatpush1.bf16.msra.mxu0 %v442
    %583 = vmatprep.subr.bf16.mxu0 0
    %584 = vmatpush1.bf16.msra.mxu0 %v443
    %585 = vmatprep.subr.bf16.mxu0 0
    %586 = vmatpush1.bf16.msra.mxu0 %v444
    %587 = vmatprep.mubr.bf16.mxu0 %v207
    %588 = vmatmul.mubr.bf16.gmra.mrb[0].mxu0 %v206
    %v589 = vpop.f32.mrb[0].mxu0
    %v590 = vadd.f32 %v550, %v589
    %v591 = vpop.f32.mrb[0].mxu0
    %v592 = vpop.f32.mrb[0].mxu0
    %v593 = vpop.f32.mrb[0].mxu0
    %594 = vdwg.mxu0
    %595 = vmatprep.subr.bf16.mxu0 0
    %596 = vmatpush1.bf16.msra.mxu0 %v445
    %597 = vmatprep.subr.bf16.mxu0 0
    %598 = vmatpush1.bf16.msra.mxu0 %v446
    %599 = vmatprep.subr.bf16.mxu0 0
    %600 = vmatpush1.bf16.msra.mxu0 %v447
    %601 = vmatprep.subr.bf16.mxu0 0
    %602 = vmatpush1.bf16.msra.mxu0 %v448
    %603 = vmatprep.subr.bf16.mxu0 0
    %604 = vmatpush1.bf16.msra.mxu0 %v449
    %605 = vmatprep.subr.bf16.mxu0 0
    %606 = vmatpush1.bf16.msra.mxu0 %v450
    %607 = vmatprep.subr.bf16.mxu0 0
    %608 = vmatpush1.bf16.msra.mxu0 %v451
    %609 = vmatprep.subr.bf16.mxu0 0
    %610 = vmatpush1.bf16.msra.mxu0 %v452
    %611 = vmatprep.subr.bf16.mxu0 0
    %612 = vmatpush1.bf16.msra.mxu0 %v453
    %613 = vmatprep.subr.bf16.mxu0 0
    %614 = vmatpush1.bf16.msra.mxu0 %v454
    %615 = vmatprep.subr.bf16.mxu0 0
    %616 = vmatpush1.bf16.msra.mxu0 %v455
    %617 = vmatprep.subr.bf16.mxu0 0
    %618 = vmatpush1.bf16.msra.mxu0 %v456
    %619 = vmatprep.subr.bf16.mxu0 0
    %620 = vmatpush1.bf16.msra.mxu0 %v457
    %621 = vmatprep.subr.bf16.mxu0 0
    %622 = vmatpush1.bf16.msra.mxu0 %v458
    %623 = vmatprep.subr.bf16.mxu0 0
    %624 = vmatpush1.bf16.msra.mxu0 %v459
    %625 = vmatprep.subr.bf16.mxu0 0
    %626 = vmatpush1.bf16.msra.mxu0 %v460
    %627 = vmatprep.mubr.bf16.mxu0 %v209
    %628 = vmatmul.mubr.bf16.gmra.mrb[0].mxu0 %v208
    %v629 = vpop.f32.mrb[0].mxu0
    %v630 = vadd.f32 %v590, %v629
    %v631 = vpop.f32.mrb[0].mxu0
    %v632 = vpop.f32.mrb[0].mxu0
    %v633 = vpop.f32.mrb[0].mxu0
    %634 = vdwg.mxu0
    %635 = vmatprep.subr.bf16.mxu0 0
    %636 = vmatpush1.bf16.msra.mxu0 %v461
    %637 = vmatprep.subr.bf16.mxu0 0
    %638 = vmatpush1.bf16.msra.mxu0 0
    %639 = vmatprep.subr.bf16.mxu0 0
    %640 = vmatpush1.bf16.msra.mxu0 0
    %641 = vmatprep.subr.bf16.mxu0 0
    %642 = vmatpush1.bf16.msra.mxu0 0
    %643 = vmatprep.subr.bf16.mxu0 0
    %644 = vmatpush1.bf16.msra.mxu0 0
    %645 = vmatprep.subr.bf16.mxu0 0
    %646 = vmatpush1.bf16.msra.mxu0 0
    %647 = vmatprep.subr.bf16.mxu0 0
    %648 = vmatpush1.bf16.msra.mxu0 0
    %649 = vmatprep.subr.bf16.mxu0 0
    %650 = vmatpush1.bf16.msra.mxu0 0
    %651 = vmatprep.subr.bf16.mxu0 0
    %652 = vmatpush1.bf16.msra.mxu0 0
    %653 = vmatprep.subr.bf16.mxu0 0
    %654 = vmatpush1.bf16.msra.mxu0 0
    %655 = vmatprep.subr.bf16.mxu0 0
    %656 = vmatpush1.bf16.msra.mxu0 0
    %657 = vmatprep.subr.bf16.mxu0 0
    %658 = vmatpush1.bf16.msra.mxu0 0
    %659 = vmatprep.subr.bf16.mxu0 0
    %660 = vmatpush1.bf16.msra.mxu0 0
    %661 = vmatprep.subr.bf16.mxu0 0
    %662 = vmatpush1.bf16.msra.mxu0 0
    %663 = vmatprep.subr.bf16.mxu0 0
    %664 = vmatpush1.bf16.msra.mxu0 0
    %665 = vmatprep.subr.bf16.mxu0 0
    %666 = vmatpush1.bf16.msra.mxu0 0
    %667 = vmatprep.mubr.bf16.mxu0 0
    %668 = vmatmul.mubr.bf16.gmra.mrb[0].mxu0 %v513
    %v669 = vpop.f32.mrb[0].mxu0
    %v670 = vadd.f32 %v630, %v669
    %v671 = vpop.f32.mrb[0].mxu0
    %v672 = vpop.f32.mrb[0].mxu0
    %v673 = vpop.f32.mrb[0].mxu0
    %674 = vdwg.mxu0
    %v675 = vmax.f32 %v670, 0.0
    %v676 = vpack.c.bf16 %v675, %v675
    %v677 = vld [vmem:[#allocation8] sm:$0xf]
    %v678 = vld [vmem:[#allocation8 + $0x4] sm:$0xf]
    %v679 = vld [vmem:[#allocation8 + $0x8] sm:$0xf]
    %v680 = vld [vmem:[#allocation8 + $0xc] sm:$0xf]
    %v681 = vld [vmem:[#allocation8 + $0x10] sm:$0xf]
    %v682 = vld [vmem:[#allocation8 + $0x14] sm:$0xf]
    %v683 = vld [vmem:[#allocation8 + $0x18] sm:$0xf]
    %v684 = vld [vmem:[#allocation8 + $0x1c] sm:$0xf]
    %v685 = vld [vmem:[#allocation8 + $0x20] sm:$0xf]
    %v686 = vld [vmem:[#allocation8 + $0x24] sm:$0xf]
    %v687 = vld [vmem:[#allocation8 + $0x28] sm:$0xf]
    %v688 = vld [vmem:[#allocation8 + $0x2c] sm:$0xf]
    %v689 = vld [vmem:[#allocation8 + $0x30] sm:$0xf]
    %v690 = vld [vmem:[#allocation8 + $0x34] sm:$0xf]
    %v691 = vld [vmem:[#allocation8 + $0x38] sm:$0xf]
    %v692 = vld [vmem:[#allocation8 + $0x3c] sm:$0xf]
    %v693 = vld [vmem:[#allocation10] sm:$0x1]
    %v695 = vlaneseq
    %v696 = vshrl.u32 %v695, 7
    %v697 = vsub.s32 0, %v696
    %v698 = vrot.slane %v693, %v697
    %v716 = vunpack.c.l.b16 %v677
    %v717 = vunpack.c.l.b16 %v678
    %v718 = vunpack.c.l.b16 %v679
    %v719 = vunpack.c.l.b16 %v680
    %v720 = vunpack.c.l.b16 %v681
    %v721 = vunpack.c.l.b16 %v682
    %v722 = vunpack.c.l.b16 %v683
    %v723 = vunpack.c.l.b16 %v684
    %v724 = vunpack.c.l.b16 %v685
    %v725 = vunpack.c.l.b16 %v686
    %v726 = vunpack.c.l.b16 %v687
    %v727 = vunpack.c.l.b16 %v688
    %v728 = vunpack.c.l.b16 %v689
    %v729 = vunpack.c.l.b16 %v690
    %v730 = vunpack.c.l.b16 %v691
    %v731 = vunpack.c.l.b16 %v692
    %v732 = vpack.c.b16 %v717, %v716
    %v733 = vpack.c.b16 %v719, %v718
    %v734 = vpack.c.b16 %v721, %v720
    %v735 = vpack.c.b16 %v723, %v722
    %v736 = vpack.c.b16 %v725, %v724
    %v737 = vpack.c.b16 %v727, %v726
    %v738 = vpack.c.b16 %v729, %v728
    %v739 = vpack.c.b16 %v731, %v730
    %748 = vmatprep.subr.bf16.mxu0 0
    %749 = vmatpush1.bf16.msra.mxu0 %v732
    %750 = vmatprep.subr.bf16.mxu0 0
    %751 = vmatpush1.bf16.msra.mxu0 %v733
    %752 = vmatprep.subr.bf16.mxu0 0
    %753 = vmatpush1.bf16.msra.mxu0 %v734
    %754 = vmatprep.subr.bf16.mxu0 0
    %755 = vmatpush1.bf16.msra.mxu0 %v735
    %756 = vmatprep.subr.bf16.mxu0 0
    %757 = vmatpush1.bf16.msra.mxu0 %v736
    %758 = vmatprep.subr.bf16.mxu0 0
    %759 = vmatpush1.bf16.msra.mxu0 %v737
    %760 = vmatprep.subr.bf16.mxu0 0
    %761 = vmatpush1.bf16.msra.mxu0 %v738
    %762 = vmatprep.subr.bf16.mxu0 0
    %763 = vmatpush1.bf16.msra.mxu0 %v739
    %764 = vmatprep.subr.bf16.mxu0 0
    %765 = vmatpush1.bf16.msra.mxu0 0
    %766 = vmatprep.subr.bf16.mxu0 0
    %767 = vmatpush1.bf16.msra.mxu0 0
    %768 = vmatprep.subr.bf16.mxu0 0
    %769 = vmatpush1.bf16.msra.mxu0 0
    %770 = vmatprep.subr.bf16.mxu0 0
    %771 = vmatpush1.bf16.msra.mxu0 0
    %772 = vmatprep.subr.bf16.mxu0 0
    %773 = vmatpush1.bf16.msra.mxu0 0
    %774 = vmatprep.subr.bf16.mxu0 0
    %775 = vmatpush1.bf16.msra.mxu0 0
    %776 = vmatprep.subr.bf16.mxu0 0
    %777 = vmatpush1.bf16.msra.mxu0 0
    %778 = vmatprep.subr.bf16.mxu0 0
    %779 = vmatpush1.bf16.msra.mxu0 0
    %780 = vmatprep.mubr.bf16.mxu0 0
    %781 = vmatmul.mubr.bf16.gmra.mrb[0].mxu0 %v676
    %v782 = vpop.f32.mrb[0].mxu0
    %v783 = vadd.f32 %v698, %v782
    %v784 = vpop.f32.mrb[0].mxu0
    %v785 = vpop.f32.mrb[0].mxu0
    %v786 = vpop.f32.mrb[0].mxu0
    %787 = vdwg.mxu0
    %788 = vst [vmem:[#allocation11] sm:$0xff] %v783
    // Predicated region
    $region42: #{tpu_custom_call.1} parent=1 // pred_check
      _
    $region43: #{tpu_custom_call.1} parent=1 // pred_check_branch
      %790 = sbr.rel (0) target = $region45
    $region44: #{tpu_custom_call.1} parent=1 // pred_region
      %s792 = ssub.s32 128, 128
      %793 = vsyncadd [#allocation4], %s792
      %s795 = sshll.u32 [#allocation11], 4
      %s796 = int_to_ptr.vmem [resolvable:$true] %s795
      %798 = dma.vmem_to_hbm [thread:$0]  %s796, 128, %s5, [#allocation4]
    $region45: #{tpu_custom_call.1} parent=1 // pred_fallthru
      _
    // Predicated region
    $region46: #{tpu_custom_call.1} parent=1 // pred_check
      _
    $region47: #{tpu_custom_call.1} parent=1 // pred_check_branch
      %800 = sbr.rel (0) target = $region49
    $region48: #{tpu_custom_call.1} parent=1 // pred_region
      %801 = dma.done [#allocation4], 128
    $region49: #{tpu_custom_call.1} parent=1 // pred_fallthru
      _
    %802 = vsyncpa [#allocation3], 1
    %803 = vsyncpa [#allocation6], 1
    %804 = vsyncpa [#allocation9], 1
    %805 = vsyncpa [#allocation4], 1

</llo_original>
